<compile_context>
chip_gen: v7x
topology: tpu7x:2x2x1
jax: 0.10.0
libtpu: 0.0.40
codegen_flags: <defaults>
</compile_context>

<pallas_src>
import functools

import jax
import jax.numpy as jnp
from jax.experimental import pallas as pl
from jax.experimental.pallas import tpu as pltpu


def _round_up(x, m):
    return ((x + m - 1) // m) * m


def _ffn_kernel(x_ref, w1_ref, b1_ref, w2_ref, b2_ref, o_ref, acc_ref):
    # x_ref : (tile_m, dim_p)  bf16
    # w1_ref: (dim_p, tile_h)  bf16      b1_ref: (1, tile_h) f32
    # w2_ref: (tile_h, dim_p)  bf16      b2_ref: (1, dim_p)  f32
    # o_ref : (tile_m, dim_p)  out dtype
    # acc_ref: (tile_m, dim_p) f32 VMEM accumulator (resident across the hidden axis)
    k = pl.program_id(1)

    @pl.when(k == 0)
    def _init():
        acc_ref[...] = jnp.zeros_like(acc_ref)

    # First matmul on the MXU (bf16 in, f32 accumulate), then bias + exact (erf) GELU in f32.
    h = jnp.dot(x_ref[...], w1_ref[...], preferred_element_type=jnp.float32)
    h = h + b1_ref[...]
    h = 0.5 * h * (1.0 + jax.lax.erf(h * jnp.float32(0.7071067811865476)))

    # Second matmul: accumulate this hidden chunk's contribution in f32.
    acc_ref[...] += jnp.dot(h.astype(jnp.bfloat16), w2_ref[...],
                            preferred_element_type=jnp.float32)

    @pl.when(k == pl.num_programs(1) - 1)
    def _finalize():
        o_ref[...] = (acc_ref[...] + b2_ref[...]).astype(o_ref.dtype)


@functools.partial(jax.jit, static_argnames=("tile_m", "tile_h"))
def feed_forward(x, w1, b1, w2, b2, *, tile_m=256, tile_h=512):
    """x: (B, N, dim). w1: (dim, hidden), b1: (hidden,), w2: (hidden, dim), b2: (dim,)."""
    B, N, dim = x.shape
    hidden = w1.shape[1]
    tokens = B * N
    out_dtype = x.dtype

    # --- derive padded / tiled shapes -------------------------------------------------
    dim_p = _round_up(dim, 128)                       # lane-dense feature axis
    tile_h_eff = min(tile_h, _round_up(hidden, 128))  # hidden chunk (multiple of 128)
    tile_h_eff = _round_up(tile_h_eff, 128)
    hid_p = _round_up(hidden, tile_h_eff)
    tile_m_eff = _round_up(min(tile_m, _round_up(tokens, 8)), 8)
    tokens_p = _round_up(tokens, tile_m_eff)

    # --- pad & cast inputs (zero padding is neutral for this FFN) ---------------------
    x2d = x.reshape(tokens, dim)
    x2d = jnp.pad(x2d, ((0, tokens_p - tokens), (0, dim_p - dim))).astype(jnp.bfloat16)
    w1_p = jnp.pad(w1, ((0, dim_p - dim), (0, hid_p - hidden))).astype(jnp.bfloat16)
    w2_p = jnp.pad(w2, ((0, hid_p - hidden), (0, dim_p - dim))).astype(jnp.bfloat16)
    b1_p = jnp.pad(b1, (0, hid_p - hidden)).reshape(1, hid_p).astype(jnp.float32)
    b2_p = jnp.pad(b2, (0, dim_p - dim)).reshape(1, dim_p).astype(jnp.float32)

    grid = (tokens_p // tile_m_eff, hid_p // tile_h_eff)

    # --- VMEM budget (double-buffered streamed blocks + accumulator + intermediate h) --
    vmem_est = (
        2 * tile_m_eff * dim_p * 2          # x tile (bf16), double-buffered
        + 2 * dim_p * tile_h_eff * 2        # W1 chunk (bf16)
        + 2 * tile_h_eff * dim_p * 2        # W2 chunk (bf16)
        + 2 * 8 * tile_h_eff * 4            # b1 chunk (f32, sublane padded)
        + 2 * 8 * dim_p * 4                 # b2 (f32)
        + 2 * tile_m_eff * dim_p * 4        # output tile (f32)
        + tile_m_eff * dim_p * 4            # accumulator scratch
        + 2 * tile_m_eff * tile_h_eff * 4   # intermediate h + slack
    )
    vmem_limit = min(vmem_est + (8 << 20), 64 << 20)

    cost = pl.CostEstimate(
        flops=4 * tokens_p * dim_p * hid_p,           # two matmuls
        transcendentals=tokens_p * hid_p,             # erf
        bytes_accessed=(x2d.size * 2 + w1_p.size * 2 + w2_p.size * 2
                        + b1_p.size * 4 + b2_p.size * 4 + tokens_p * dim_p * 4),
    )

    out2d = pl.pallas_call(
        _ffn_kernel,
        out_shape=jax.ShapeDtypeStruct((tokens_p, dim_p), out_dtype),
        grid_spec=pltpu.PrefetchScalarGridSpec(
            num_scalar_prefetch=0,
            grid=grid,
            in_specs=[
                pl.BlockSpec((tile_m_eff, dim_p), lambda i, k: (i, 0)),   # x tile
                pl.BlockSpec((dim_p, tile_h_eff), lambda i, k: (0, k)),   # W1 hidden chunk
                pl.BlockSpec((1, tile_h_eff), lambda i, k: (0, k)),       # b1 chunk
                pl.BlockSpec((tile_h_eff, dim_p), lambda i, k: (k, 0)),   # W2 hidden chunk
                pl.BlockSpec((1, dim_p), lambda i, k: (0, 0)),            # b2
            ],
            out_specs=pl.BlockSpec((tile_m_eff, dim_p), lambda i, k: (i, 0)),
            scratch_shapes=[pltpu.VMEM((tile_m_eff, dim_p), jnp.float32)],
        ),
        compiler_params=pltpu.CompilerParams(
            dimension_semantics=("parallel", "arbitrary"),
            vmem_limit_bytes=int(vmem_limit),
        ),
        cost_estimate=cost,
    )(x2d, w1_p, b1_p, w2_p, b2_p)

    return out2d[:tokens, :dim].reshape(B, N, dim)


def _reference(x, w1, b1, w2, b2):
    h = x @ w1 + b1
    h = 0.5 * h * (1.0 + jax.lax.erf(h / jnp.sqrt(2.0)))
    return h @ w2 + b2


if __name__ == "__main__":
    # Small shapes consistent with the module: batch=2, seq=8, dim=32, hidden=64.
    B, N, dim, hidden = 2, 8, 32, 64

    key = jax.random.PRNGKey(0)
    kx, kw1, kb1, kw2, kb2 = jax.random.split(key, 5)

    x = jax.random.normal(kx, (B, N, dim), dtype=jnp.float32)
    # Deterministic synthetic parameters (shapes match nn.Linear(dim,hidden) / (hidden,dim)).
    w1 = jax.random.normal(kw1, (dim, hidden), dtype=jnp.float32) * 0.02
    b1 = jax.random.normal(kb1, (hidden,), dtype=jnp.float32) * 0.02
    w2 = jax.random.normal(kw2, (hidden, dim), dtype=jnp.float32) * 0.02
    b2 = jax.random.normal(kb2, (dim,), dtype=jnp.float32) * 0.02

    out = feed_forward(x, w1, b1, w2, b2)
    out = jax.block_until_ready(out)

    ref = _reference(x.reshape(-1, dim), w1, b1, w2, b2).reshape(B, N, dim)
    assert out.shape == (B, N, dim)
    # bf16 MXU inputs with f32 accumulation -> looser tolerance than a pure-f32 path.
    assert jnp.allclose(out, ref, atol=2e-2, rtol=2e-2), "mismatch vs reference"

    print("KERNEL_OK")
</pallas_src>

<mosaic_0001>
module attributes {stable_mosaic.version = 11 : i64} {
  func.func @_ffn_kernel(%arg0: i32, %arg1: i32, %arg2: memref<16x128xbf16, #tpu.memory_space<vmem>>, %arg3: memref<128x128xbf16, #tpu.memory_space<vmem>>, %arg4: memref<1x128xf32, #tpu.memory_space<vmem>>, %arg5: memref<128x128xbf16, #tpu.memory_space<vmem>>, %arg6: memref<1x128xf32, #tpu.memory_space<vmem>>, %arg7: memref<16x128xf32, #tpu.memory_space<vmem>>, %arg8: memref<16x128xf32, #tpu.memory_space<vmem>>) attributes {dimension_semantics = [#tpu.dimension_semantics<parallel>, #tpu.dimension_semantics<arbitrary>], iteration_bounds = array<i64: 1, 1>, scalar_prefetch = 0 : i64, scratch_operands = 1 : i64, tpu.core_type = #tpu.core_type<tc>, window_params = [{transform_indices = @transform_0, window_bounds = array<i64: 16, 128>}, {transform_indices = @transform_1, window_bounds = array<i64: 128, 128>}, {transform_indices = @transform_2, window_bounds = array<i64: 1, 128>}, {transform_indices = @transform_3, window_bounds = array<i64: 128, 128>}, {pipeline_mode = #tpu.pipeline_mode<synchronous>, transform_indices = @transform_4, window_bounds = array<i64: 1, 128>}, {transform_indices = @transform_5, window_bounds = array<i64: 16, 128>}]} {
    %c0_i32 = arith.constant 0 : i32
    %0 = arith.cmpi eq, %arg1, %c0_i32 : i32
    %1 = arith.extui %0 : i1 to i32
    %c0_i32_0 = arith.constant 0 : i32
    %2 = arith.cmpi ne, %1, %c0_i32_0 : i32
    scf.if %2 {
      %cst_18 = arith.constant 0.000000e+00 : f32
      %26 = vector.broadcast %cst_18 : f32 to vector<16x128xf32>
      %c0_19 = arith.constant 0 : index
      %c0_20 = arith.constant 0 : index
      %27 = vector.load %arg8[%c0_19, %c0_20] : memref<16x128xf32, #tpu.memory_space<vmem>>, vector<16x128xf32>
      tpu.vector_store %arg8[%c0_19, %c0_20], %26 {strides = array<i32>} : memref<16x128xf32, #tpu.memory_space<vmem>>, vector<16x128xf32>,
    } else {
    }
    %c0 = arith.constant 0 : index
    %c0_1 = arith.constant 0 : index
    %3 = vector.load %arg2[%c0, %c0_1] : memref<16x128xbf16, #tpu.memory_space<vmem>>, vector<16x128xbf16>
    %c0_2 = arith.constant 0 : index
    %c0_3 = arith.constant 0 : index
    %4 = vector.load %arg3[%c0_2, %c0_3] : memref<128x128xbf16, #tpu.memory_space<vmem>>, vector<128x128xbf16>
    %cst = arith.constant dense<0.000000e+00> : vector<16x128xf32>
    %5 = tpu.matmul %3, %4, %cst {dimension_numbers = #tpu.dot_dimension_numbers<[1], [0], [0], [1], [0, 0, 1, 1], [], []>} : vector<16x128xbf16>, vector<128x128xbf16>, vector<16x128xf32> -> vector<16x128xf32>
    %c0_4 = arith.constant 0 : index
    %c0_5 = arith.constant 0 : index
    %6 = vector.load %arg4[%c0_4, %c0_5] : memref<1x128xf32, #tpu.memory_space<vmem>>, vector<1x128xf32>
    %7 = vector.broadcast %6 : vector<1x128xf32> to vector<16x128xf32>
    %8 = arith.addf %5, %7 : vector<16x128xf32>
    %cst_6 = arith.constant 5.000000e-01 : f32
    %9 = vector.broadcast %cst_6 : f32 to vector<16x128xf32>
    %10 = arith.mulf %9, %8 : vector<16x128xf32>
    %cst_7 = arith.constant 0.707106769 : f32
    %11 = vector.broadcast %cst_7 : f32 to vector<16x128xf32>
    %12 = arith.mulf %8, %11 : vector<16x128xf32>
    %13 = math.erf %12 : vector<16x128xf32>
    %cst_8 = arith.constant 1.000000e+00 : f32
    %14 = vector.broadcast %cst_8 : f32 to vector<16x128xf32>
    %15 = arith.addf %14, %13 : vector<16x128xf32>
    %16 = arith.mulf %10, %15 : vector<16x128xf32>
    %c0_9 = arith.constant 0 : index
    %c0_10 = arith.constant 0 : index
    %17 = vector.load %arg8[%c0_9, %c0_10] : memref<16x128xf32, #tpu.memory_space<vmem>>, vector<16x128xf32>
    %18 = arith.truncf %16 : vector<16x128xf32> to vector<16x128xbf16>
    %c0_11 = arith.constant 0 : index
    %c0_12 = arith.constant 0 : index
    %19 = vector.load %arg5[%c0_11, %c0_12] : memref<128x128xbf16, #tpu.memory_space<vmem>>, vector<128x128xbf16>
    %cst_13 = arith.constant dense<0.000000e+00> : vector<16x128xf32>
    %20 = tpu.matmul %18, %19, %cst_13 {dimension_numbers = #tpu.dot_dimension_numbers<[1], [0], [0], [1], [0, 0, 1, 1], [], []>} : vector<16x128xbf16>, vector<128x128xbf16>, vector<16x128xf32> -> vector<16x128xf32>
    %21 = arith.addf %17, %20 : vector<16x128xf32>
    %c0_14 = arith.constant 0 : index
    %c0_15 = arith.constant 0 : index
    %22 = vector.load %arg8[%c0_14, %c0_15] : memref<16x128xf32, #tpu.memory_space<vmem>>, vector<16x128xf32>
    tpu.vector_store %arg8[%c0_14, %c0_15], %21 {strides = array<i32>} : memref<16x128xf32, #tpu.memory_space<vmem>>, vector<16x128xf32>,
    %c0_i32_16 = arith.constant 0 : i32
    %23 = arith.cmpi eq, %arg1, %c0_i32_16 : i32
    %24 = arith.extui %23 : i1 to i32
    %c0_i32_17 = arith.constant 0 : i32
    %25 = arith.cmpi ne, %24, %c0_i32_17 : i32
    scf.if %25 {
      %c0_18 = arith.constant 0 : index
      %c0_19 = arith.constant 0 : index
      %26 = vector.load %arg8[%c0_18, %c0_19] : memref<16x128xf32, #tpu.memory_space<vmem>>, vector<16x128xf32>
      %c0_20 = arith.constant 0 : index
      %c0_21 = arith.constant 0 : index
      %27 = vector.load %arg6[%c0_20, %c0_21] : memref<1x128xf32, #tpu.memory_space<vmem>>, vector<1x128xf32>
      %28 = vector.broadcast %27 : vector<1x128xf32> to vector<16x128xf32>
      %29 = arith.addf %26, %28 : vector<16x128xf32>
      %c0_22 = arith.constant 0 : index
      %c0_23 = arith.constant 0 : index
      %30 = vector.load %arg7[%c0_22, %c0_23] : memref<16x128xf32, #tpu.memory_space<vmem>>, vector<16x128xf32>
      tpu.vector_store %arg7[%c0_22, %c0_23], %29 {strides = array<i32>} : memref<16x128xf32, #tpu.memory_space<vmem>>, vector<16x128xf32>,
    } else {
    }
    return
  }
  func.func @transform_0(%arg0: i32, %arg1: i32) -> (i32, i32) {
    %c0_i32 = arith.constant 0 : i32
    %c0_i32_0 = arith.constant 0 : i32
    return %arg0, %c0_i32 : i32, i32
  }
  func.func @transform_1(%arg0: i32, %arg1: i32) -> (i32, i32) {
    %c0_i32 = arith.constant 0 : i32
    %c0_i32_0 = arith.constant 0 : i32
    return %c0_i32, %arg1 : i32, i32
  }
  func.func @transform_2(%arg0: i32, %arg1: i32) -> (i32, i32) {
    %c0_i32 = arith.constant 0 : i32
    %c0_i32_0 = arith.constant 0 : i32
    return %c0_i32, %arg1 : i32, i32
  }
  func.func @transform_3(%arg0: i32, %arg1: i32) -> (i32, i32) {
    %c0_i32 = arith.constant 0 : i32
    %c0_i32_0 = arith.constant 0 : i32
    return %arg1, %c0_i32 : i32, i32
  }
  func.func @transform_4(%arg0: i32, %arg1: i32) -> (i32, i32) {
    %c0_i32 = arith.constant 0 : i32
    %c0_i32_0 = arith.constant 0 : i32
    %c0_i32_1 = arith.constant 0 : i32
    return %c0_i32, %c0_i32_0 : i32, i32
  }
  func.func @transform_5(%arg0: i32, %arg1: i32) -> (i32, i32) {
    %c0_i32 = arith.constant 0 : i32
    %c0_i32_0 = arith.constant 0 : i32
    return %arg0, %c0_i32 : i32, i32
  }
}

</mosaic_0001>

<llo_original>
// kernel: feed_forward.1
$region0: #{feed_forward.1}
  #allocation0 [shape = 'u32[]', space=smem, size = 0x4, offset = 0x4, fixed_abs, tag = 'smem constant byte address 0x4 - core index']
  #allocation1 [shape = 'u32[144,128]{1,0:T(1,128)}', space=vmem, size = 0x12000, scoped, tag = 'internal scratch']
  #allocation2 [shape = 'f32[16,128]{1,0:T(8,128)}', space=vmem, size = 0x2000, scoped, tag = 'scratch operand']
  %s0 = inlined_call_operand.vmem [shape: bf16[16,128], index: 0, kind: input, shape index: {}]
  %s1 = inlined_call_operand.vmem [shape: bf16[128,128], index: 1, kind: input, shape index: {}]
  %s2 = inlined_call_operand.vmem [shape: f32[1,128], index: 2, kind: input, shape index: {}]
  %s3 = inlined_call_operand.vmem [shape: bf16[128,128], index: 3, kind: input, shape index: {}]
  %s4 = inlined_call_operand.vmem [shape: f32[1,128], index: 4, kind: input, shape index: {}]
  %s5 = inlined_call_operand.vmem [shape: f32[16,128], index: 5, kind: output, shape index: {}]
  %s6 = sld [smem:[#allocation0]]
  $region38: #{feed_forward.1} parent=0
    _
  %s8 = ssub.s32 1, %s6
  %s9 = scalar_select 0, %s8, %s6
  // Predicated region
  $region2: #{feed_forward.1} parent=0 // pred_check
    _
  $region3: #{feed_forward.1} parent=0 // pred_check_branch
    %11 = sbr.rel (0) target = $region5
  $region4: #{feed_forward.1} parent=0 // pred_region
    _
  $region5: #{feed_forward.1} parent=0 // pred_fallthru
    _
  // Predicated region
  $region6: #{feed_forward.1} parent=0 // pred_check
    _
  $region7: #{feed_forward.1} parent=0 // pred_check_branch
    %13 = sbr.rel (0) target = $region9
  $region8: #{feed_forward.1} parent=0 // pred_region
    _
  $region9: #{feed_forward.1} parent=0 // pred_fallthru
    _
  // Predicated region
  $region10: #{feed_forward.1} parent=0 // pred_check
    _
  $region11: #{feed_forward.1} parent=0 // pred_check_branch
    %15 = sbr.rel (0) target = $region13
  $region12: #{feed_forward.1} parent=0 // pred_region
    _
  $region13: #{feed_forward.1} parent=0 // pred_fallthru
    _
  // Predicated region
  $region14: #{feed_forward.1} parent=0 // pred_check
    _
  $region15: #{feed_forward.1} parent=0 // pred_check_branch
    %17 = sbr.rel (0) target = $region17
  $region16: #{feed_forward.1} parent=0 // pred_region
    _
  $region17: #{feed_forward.1} parent=0 // pred_fallthru
    _
  // Predicated region
  $region18: #{feed_forward.1} parent=0 // pred_check
    _
  $region19: #{feed_forward.1} parent=0 // pred_check_branch
    %19 = sbr.rel (0) target = $region21
  $region20: #{feed_forward.1} parent=0 // pred_region
    _
  $region21: #{feed_forward.1} parent=0 // pred_fallthru
    _
  %p21 = scmp.eq.s32.totalorder 0, 0
  // Predicated region
  $region22: #{feed_forward.1} parent=0 // pred_check
    %p22 = pneg %p21
  $region23: #{feed_forward.1} parent=0 // pred_check_branch
    %24 = sbr.rel (%p22) target = $region25
  $region24: #{feed_forward.1} parent=0 // pred_region
    %25 = vst [vmem:[#allocation2] sm:$0xff] 0.0
    %26 = vst [vmem:[#allocation2 + $0x8] sm:$0xff] 0.0
  $region25: #{feed_forward.1} parent=0 // pred_fallthru
    _
  %v27 = vld [vmem:[%s0] sm:$0xf]
  %v28 = vld [vmem:[%s0 + $0x4] sm:$0xf]
  %v29 = vld [vmem:[%s1] sm:$0xf]
  %v30 = vld [vmem:[%s1 + $0x4] sm:$0xf]
  %v31 = vld [vmem:[%s1 + $0x8] sm:$0xf]
  %v32 = vld [vmem:[%s1 + $0xc] sm:$0xf]
  %v33 = vld [vmem:[%s1 + $0x10] sm:$0xf]
  %v34 = vld [vmem:[%s1 + $0x14] sm:$0xf]
  %v35 = vld [vmem:[%s1 + $0x18] sm:$0xf]
  %v36 = vld [vmem:[%s1 + $0x1c] sm:$0xf]
  %v37 = vld [vmem:[%s1 + $0x20] sm:$0xf]
  %v38 = vld [vmem:[%s1 + $0x24] sm:$0xf]
  %v39 = vld [vmem:[%s1 + $0x28] sm:$0xf]
  %v40 = vld [vmem:[%s1 + $0x2c] sm:$0xf]
  %v41 = vld [vmem:[%s1 + $0x30] sm:$0xf]
  %v42 = vld [vmem:[%s1 + $0x34] sm:$0xf]
  %v43 = vld [vmem:[%s1 + $0x38] sm:$0xf]
  %v44 = vld [vmem:[%s1 + $0x3c] sm:$0xf]
  %v45 = vld [vmem:[%s2] sm:$0x1]
  %v47 = vlaneseq
  %v48 = vshrl.u32 %v47, 7
  %v49 = vsub.s32 0, %v48
  %v50 = vrot.slane %v45, %v49
  %v54 = vunpack.c.l.b16 %v27
  %v55 = vunpack.c.l.b16 %v28
  %v56 = vpack.c.b16 %v55, %v54
  %v74 = vunpack.c.l.b16 %v29
  %v75 = vunpack.c.l.b16 %v30
  %v76 = vunpack.c.l.b16 %v31
  %v77 = vunpack.c.l.b16 %v32
  %v78 = vunpack.c.l.b16 %v33
  %v79 = vunpack.c.l.b16 %v34
  %v80 = vunpack.c.l.b16 %v35
  %v81 = vunpack.c.l.b16 %v36
  %v82 = vunpack.c.l.b16 %v37
  %v83 = vunpack.c.l.b16 %v38
  %v84 = vunpack.c.l.b16 %v39
  %v85 = vunpack.c.l.b16 %v40
  %v86 = vunpack.c.l.b16 %v41
  %v87 = vunpack.c.l.b16 %v42
  %v88 = vunpack.c.l.b16 %v43
  %v89 = vunpack.c.l.b16 %v44
  %v90 = vpack.c.b16 %v75, %v74
  %v91 = vpack.c.b16 %v77, %v76
  %v92 = vpack.c.b16 %v79, %v78
  %v93 = vpack.c.b16 %v81, %v80
  %v94 = vpack.c.b16 %v83, %v82
  %v95 = vpack.c.b16 %v85, %v84
  %v96 = vpack.c.b16 %v87, %v86
  %v97 = vpack.c.b16 %v89, %v88
  %106 = vmatprep.subr.bf16.mxu0 0
  %107 = vmatpush1.bf16.msra.mxu0 %v90
  %108 = vmatprep.subr.bf16.mxu0 0
  %109 = vmatpush1.bf16.msra.mxu0 %v91
  %110 = vmatprep.subr.bf16.mxu0 0
  %111 = vmatpush1.bf16.msra.mxu0 %v92
  %112 = vmatprep.subr.bf16.mxu0 0
  %113 = vmatpush1.bf16.msra.mxu0 %v93
  %114 = vmatprep.subr.bf16.mxu0 0
  %115 = vmatpush1.bf16.msra.mxu0 %v94
  %116 = vmatprep.subr.bf16.mxu0 0
  %117 = vmatpush1.bf16.msra.mxu0 %v95
  %118 = vmatprep.subr.bf16.mxu0 0
  %119 = vmatpush1.bf16.msra.mxu0 %v96
  %120 = vmatprep.subr.bf16.mxu0 0
  %121 = vmatpush1.bf16.msra.mxu0 %v97
  %122 = vmatprep.subr.bf16.mxu0 0
  %123 = vmatpush1.bf16.msra.mxu0 0
  %124 = vmatprep.subr.bf16.mxu0 0
  %125 = vmatpush1.bf16.msra.mxu0 0
  %126 = vmatprep.subr.bf16.mxu0 0
  %127 = vmatpush1.bf16.msra.mxu0 0
  %128 = vmatprep.subr.bf16.mxu0 0
  %129 = vmatpush1.bf16.msra.mxu0 0
  %130 = vmatprep.subr.bf16.mxu0 0
  %131 = vmatpush1.bf16.msra.mxu0 0
  %132 = vmatprep.subr.bf16.mxu0 0
  %133 = vmatpush1.bf16.msra.mxu0 0
  %134 = vmatprep.subr.bf16.mxu0 0
  %135 = vmatpush1.bf16.msra.mxu0 0
  %136 = vmatprep.subr.bf16.mxu0 0
  %137 = vmatpush1.bf16.msra.mxu0 0
  %138 = vmatprep.mubr.bf16.mxu0 0
  %139 = vmatmul.mubr.bf16.gmra.mrb[0].mxu0 %v56
  %v140 = vpop.f32.mrb[0].mxu0
  %v141 = vadd.f32 %v50, %v140
  %v142 = vpop.f32.mrb[0].mxu0
  %v143 = vpop.f32.mrb[0].mxu0
  %v144 = vadd.f32 %v50, %v143
  %v145 = vpop.f32.mrb[0].mxu0
  %146 = vdwg.mxu0
  %v147 = vmul.f32 %v141, 0.5
  %v148 = vmul.f32 %v144, 0.5
  %v149 = vmul.f32 %v141, 0.70710677
  %v150 = vmul.f32 %v144, 0.70710677
  %v151 = verf.f32.pop %v149
  %v152 = verf.f32.pop %v150
  %v153 = vadd.f32 %v151, 1.0
  %v154 = vadd.f32 %v152, 1.0
  %v155 = vmul.f32 %v147, %v153
  %v156 = vmul.f32 %v148, %v154
  %v157 = vld [vmem:[#allocation2] sm:$0xff]
  %v158 = vld [vmem:[#allocation2 + $0x8] sm:$0xff]
  %v159 = vpack.c.bf16 %v156, %v155
  %v160 = vld [vmem:[%s3] sm:$0xf]
  %v161 = vld [vmem:[%s3 + $0x4] sm:$0xf]
  %v162 = vld [vmem:[%s3 + $0x8] sm:$0xf]
  %v163 = vld [vmem:[%s3 + $0xc] sm:$0xf]
  %v164 = vld [vmem:[%s3 + $0x10] sm:$0xf]
  %v165 = vld [vmem:[%s3 + $0x14] sm:$0xf]
  %v166 = vld [vmem:[%s3 + $0x18] sm:$0xf]
  %v167 = vld [vmem:[%s3 + $0x1c] sm:$0xf]
  %v168 = vld [vmem:[%s3 + $0x20] sm:$0xf]
  %v169 = vld [vmem:[%s3 + $0x24] sm:$0xf]
  %v170 = vld [vmem:[%s3 + $0x28] sm:$0xf]
  %v171 = vld [vmem:[%s3 + $0x2c] sm:$0xf]
  %v172 = vld [vmem:[%s3 + $0x30] sm:$0xf]
  %v173 = vld [vmem:[%s3 + $0x34] sm:$0xf]
  %v174 = vld [vmem:[%s3 + $0x38] sm:$0xf]
  %v175 = vld [vmem:[%s3 + $0x3c] sm:$0xf]
  %v192 = vunpack.c.l.b16 %v160
  %v193 = vunpack.c.l.b16 %v161
  %v194 = vunpack.c.l.b16 %v162
  %v195 = vunpack.c.l.b16 %v163
  %v196 = vunpack.c.l.b16 %v164
  %v197 = vunpack.c.l.b16 %v165
  %v198 = vunpack.c.l.b16 %v166
  %v199 = vunpack.c.l.b16 %v167
  %v200 = vunpack.c.l.b16 %v168
  %v201 = vunpack.c.l.b16 %v169
  %v202 = vunpack.c.l.b16 %v170
  %v203 = vunpack.c.l.b16 %v171
  %v204 = vunpack.c.l.b16 %v172
  %v205 = vunpack.c.l.b16 %v173
  %v206 = vunpack.c.l.b16 %v174
  %v207 = vunpack.c.l.b16 %v175
  %v208 = vpack.c.b16 %v193, %v192
  %v209 = vpack.c.b16 %v195, %v194
  %v210 = vpack.c.b16 %v197, %v196
  %v211 = vpack.c.b16 %v199, %v198
  %v212 = vpack.c.b16 %v201, %v200
  %v213 = vpack.c.b16 %v203, %v202
  %v214 = vpack.c.b16 %v205, %v204
  %v215 = vpack.c.b16 %v207, %v206
  %224 = vmatprep.subr.bf16.mxu0 0
  %225 = vmatpush1.bf16.msra.mxu0 %v208
  %226 = vmatprep.subr.bf16.mxu0 0
  %227 = vmatpush1.bf16.msra.mxu0 %v209
  %228 = vmatprep.subr.bf16.mxu0 0
  %229 = vmatpush1.bf16.msra.mxu0 %v210
  %230 = vmatprep.subr.bf16.mxu0 0
  %231 = vmatpush1.bf16.msra.mxu0 %v211
  %232 = vmatprep.subr.bf16.mxu0 0
  %233 = vmatpush1.bf16.msra.mxu0 %v212
  %234 = vmatprep.subr.bf16.mxu0 0
  %235 = vmatpush1.bf16.msra.mxu0 %v213
  %236 = vmatprep.subr.bf16.mxu0 0
  %237 = vmatpush1.bf16.msra.mxu0 %v214
  %238 = vmatprep.subr.bf16.mxu0 0
  %239 = vmatpush1.bf16.msra.mxu0 %v215
  %240 = vmatprep.subr.bf16.mxu0 0
  %241 = vmatpush1.bf16.msra.mxu0 0
  %242 = vmatprep.subr.bf16.mxu0 0
  %243 = vmatpush1.bf16.msra.mxu0 0
  %244 = vmatprep.subr.bf16.mxu0 0
  %245 = vmatpush1.bf16.msra.mxu0 0
  %246 = vmatprep.subr.bf16.mxu0 0
  %247 = vmatpush1.bf16.msra.mxu0 0
  %248 = vmatprep.subr.bf16.mxu0 0
  %249 = vmatpush1.bf16.msra.mxu0 0
  %250 = vmatprep.subr.bf16.mxu0 0
  %251 = vmatpush1.bf16.msra.mxu0 0
  %252 = vmatprep.subr.bf16.mxu0 0
  %253 = vmatpush1.bf16.msra.mxu0 0
  %254 = vmatprep.subr.bf16.mxu0 0
  %255 = vmatpush1.bf16.msra.mxu0 0
  %256 = vmatprep.mubr.bf16.mxu0 0
  %257 = vmatmul.mubr.bf16.gmra.mrb[0].mxu0 %v159
  %v258 = vpop.f32.mrb[0].mxu0
  %v259 = vadd.f32 0.0, %v258
  %v260 = vpop.f32.mrb[0].mxu0
  %v261 = vpop.f32.mrb[0].mxu0
  %v262 = vadd.f32 0.0, %v261
  %v263 = vpop.f32.mrb[0].mxu0
  %264 = vdwg.mxu0
  %v265 = vadd.f32 %v157, %v259
  %v266 = vadd.f32 %v158, %v262
  %267 = vst [vmem:[#allocation2] sm:$0xff] %v265
  %268 = vst [vmem:[#allocation2 + $0x8] sm:$0xff] %v266
  // Predicated region
  $region26: #{feed_forward.1} parent=0 // pred_check
    %p269 = pneg %p21
  $region27: #{feed_forward.1} parent=0 // pred_check_branch
    %271 = sbr.rel (%p269) target = $region29
  $region28: #{feed_forward.1} parent=0 // pred_region
    %v272 = vld [vmem:[#allocation2] sm:$0xff]
    %v273 = vld [vmem:[#allocation2 + $0x8] sm:$0xff]
    %v274 = vld [vmem:[%s4] sm:$0x1]
    %v276 = vlaneseq
    %v277 = vshrl.u32 %v276, 7
    %v278 = vsub.s32 0, %v277
    %v279 = vrot.slane %v274, %v278
    %v281 = vadd.f32 %v272, %v279
    %v282 = vadd.f32 %v273, %v279
    %283 = vst [vmem:[%s5] sm:$0xff] %v281
    %284 = vst [vmem:[%s5 + $0x8] sm:$0xff] %v282
  $region29: #{feed_forward.1} parent=0 // pred_fallthru
    _
  // Predicated region
  $region30: #{feed_forward.1} parent=0 // pred_check
    _
  $region31: #{feed_forward.1} parent=0 // pred_check_branch
    %286 = sbr.rel (0) target = $region33
  $region32: #{feed_forward.1} parent=0 // pred_region
    _
  $region33: #{feed_forward.1} parent=0 // pred_fallthru
    _
  // Predicated region
  $region34: #{feed_forward.1} parent=0 // pred_check
    _
  $region35: #{feed_forward.1} parent=0 // pred_check_branch
    %288 = sbr.rel (0) target = $region37
  $region36: #{feed_forward.1} parent=0 // pred_region
    _
  $region37: #{feed_forward.1} parent=0 // pred_fallthru
    _

</llo_original>
